<compile_context>
chip_gen: v7x
topology: tpu7x:2x2x1
jax: 0.10.0
libtpu: 0.0.40
codegen_flags: <defaults>
</compile_context>

<pallas_src>
import functools

import jax
import jax.numpy as jnp
from jax import lax
from jax.experimental import pallas as pl
from jax.experimental.pallas import tpu as pltpu

_LANES = 128


def _depth_ll_kernel(clamp_lo_ref, inv2_ref, cb_ref,
                     prob_ref, gt_ref, mask_ref,
                     nll_ref, msum_ref, *, D):
    """One grid step = one (batch, pixel-row tile) slab.

    prob_ref : (D, tile_r, 128) VMEM, native dtype (batch dim squeezed)
    gt_ref   : (tile_r, 128)    VMEM
    mask_ref : (tile_r, 128)    VMEM
    clamp_lo_ref, inv2_ref, cb_ref : (B,) SMEM per-batch scalars
    nll_ref, msum_ref : (1, 128) per-(b, h) partial outputs (no revisiting).
    """
    b = pl.program_id(0)

    clamp_lo = clamp_lo_ref[b]      # 1e-12 * d0
    inv_2logr = inv2_ref[b]         # 1 / (2 * log_r)
    c_b = cb_ref[b]                 # 0.5 - log(d0) / (2 * log_r)

    gt = gt_ref[...].astype(jnp.float32)     # (tile_r, 128)
    m = mask_ref[...].astype(jnp.float32)    # (tile_r, 128)

    # idx_f = (log(clamp(gt/d0, 1e-12)) + log_r) / (2*log_r)
    #       = log(max(gt, 1e-12*d0)) * inv_2logr + c_b   (one log + one FMA)
    idx_f = jnp.log(jnp.maximum(gt, clamp_lo)) * inv_2logr + c_b
    # trunc-toward-zero matches torch .long(); then clamp to [0, D-1].
    idx = jnp.clip(idx_f.astype(jnp.int32), 0, D - 1)     # (tile_r, 128)

    # Gather along D as a per-d select loop: only two (tile_r, 128) slabs are
    # live at once, and the select stays in the prob's native dtype (exact,
    # since exactly one hypothesis matches per pixel).
    p_native = jnp.zeros(idx.shape, prob_ref.dtype)
    if D <= 64:
        for d in range(D):
            p_native = jnp.where(idx == d, prob_ref[d], p_native)
    else:
        def select_d(d, acc):
            return jnp.where(idx == d, prob_ref[d], acc)
        p_native = lax.fori_loop(0, D, select_d, p_native, unroll=8)

    p = p_native.astype(jnp.float32)
    contrib = -jnp.log(p + 1e-6) * m

    # Per-step sublane reduction (XLU slot) -> tiny (1, 128) partial outputs.
    nll_ref[...] = jnp.sum(contrib, axis=0, keepdims=True)
    msum_ref[...] = jnp.sum(m, axis=0, keepdims=True)


def _vmem_capacity_bytes():
    """Per-core VMEM capacity; device_kind-based fallback if the query fails."""
    try:
        info = pltpu.get_tpu_info()
        cap = getattr(info, "vmem_capacity_bytes", None)
        if cap:
            return int(cap)
    except Exception:
        pass
    try:
        kind = jax.devices()[0].device_kind.lower()
    except Exception:
        kind = ""
    if "v7" in kind or "7x" in kind:
        return 64 << 20      # v7x: 64 MiB per TensorCore
    if "v5" in kind or "v6" in kind:
        return 128 << 20     # v5e / v5p / v6e: 128 MiB
    return 64 << 20          # unknown: be conservative


def _pick_tile_rows(R, D, prob_itemsize, vmem_budget):
    """Largest multiple-of-8 row tile whose double-buffered working set
    (prob + gt + mask streams + in-kernel temporaries) fits the budget."""
    bytes_per_row = (2 * (D * _LANES * prob_itemsize     # prob, double-buffered
                          + 2 * _LANES * 4)              # gt + mask, double-buffered
                     + 8 * _LANES * 4)                   # idx/gt/m/p/contrib temps
    tile_r = (vmem_budget // bytes_per_row) // 8 * 8
    r_ceil = -(-R // 8) * 8                              # R rounded up to mult of 8
    # TODO(synk): add an inner "arbitrary" D-tile grid axis for extreme shapes
    # where even an 8-row tile exceeds the budget (huge D*W on v7x 64 MiB VMEM).
    tile_r = max(8, min(tile_r, r_ceil))
    return tile_r, tile_r * bytes_per_row


def depth_log_likelihood_loss(depth_prob_volume, gt_depth, mask, depth_values):
    B, D, H, W = depth_prob_volume.shape
    assert gt_depth.shape == (B, 1, H, W)
    assert mask.shape == (B, 1, H, W)
    assert depth_values.shape == (B, D) and D >= 2

    # --- tile sizing from VMEM capacity ------------------------------------
    cap = _vmem_capacity_bytes()
    budget = int(cap * 0.60)
    item = jnp.dtype(depth_prob_volume.dtype).itemsize
    N = H * W
    R = -(-N // _LANES)                      # lane-dense pixel rows
    tile_r, ws = _pick_tile_rows(R, D, item, budget)
    grid_p = -(-R // tile_r)
    R_pad = grid_p * tile_r
    N_pad = R_pad * _LANES
    vmem_limit = int(min(cap * 0.9, max(ws + (16 << 20), 32 << 20)))

    # --- flatten pixels to lane-dense (R_pad, 128) rows ---------------------
    # Padded pixels carry mask = 0 and prob = 0, so they contribute nothing;
    # when H*W already matches the tile granularity the reshape is free.
    prob = depth_prob_volume.reshape(B, D, N)
    gt = gt_depth.reshape(B, N)
    msk = mask.reshape(B, N)
    if N_pad != N:
        pad = N_pad - N
        prob = jnp.pad(prob, ((0, 0), (0, 0), (0, pad)))
        gt = jnp.pad(gt, ((0, 0), (0, pad)))
        msk = jnp.pad(msk, ((0, 0), (0, pad)))
    prob = prob.reshape(B, D, R_pad, _LANES)
    gt = gt.reshape(B, R_pad, _LANES)
    msk = msk.reshape(B, R_pad, _LANES)

    # --- per-batch scalar glue (tiny) ---------------------------------------
    dv = depth_values.astype(jnp.float32)
    d0 = dv[:, 0]
    log_r = 0.5 * jnp.log(dv[:, 1] / dv[:, 0])
    inv_2logr = 1.0 / (2.0 * log_r)
    c_b = 0.5 - jnp.log(d0) * inv_2logr
    clamp_lo = 1e-12 * d0

    grid = (B, grid_p)
    kernel = functools.partial(_depth_ll_kernel, D=D)

    bytes_accessed = (B * D * R_pad * _LANES * item          # prob stream
                      + 2 * B * R_pad * _LANES * 4           # gt + mask
                      + 2 * B * grid_p * _LANES * 4)         # tiny partials
    cost = pl.CostEstimate(
        flops=B * R_pad * _LANES * (D + 10),
        transcendentals=2 * B * R_pad * _LANES,
        bytes_accessed=bytes_accessed)

    nll_part, m_part = pl.pallas_call(
        kernel,
        out_shape=(jax.ShapeDtypeStruct((B, grid_p, 1, _LANES), jnp.float32),
                   jax.ShapeDtypeStruct((B, grid_p, 1, _LANES), jnp.float32)),
        grid_spec=pl.GridSpec(
            grid=grid,
            in_specs=[
                pl.BlockSpec(memory_space=pltpu.MemorySpace.SMEM),   # clamp_lo
                pl.BlockSpec(memory_space=pltpu.MemorySpace.SMEM),   # inv_2logr
                pl.BlockSpec(memory_space=pltpu.MemorySpace.SMEM),   # c_b
                pl.BlockSpec((None, D, tile_r, _LANES),
                             lambda b, h: (b, 0, h, 0)),             # prob
                pl.BlockSpec((None, tile_r, _LANES),
                             lambda b, h: (b, h, 0)),                # gt
                pl.BlockSpec((None, tile_r, _LANES),
                             lambda b, h: (b, h, 0)),                # mask
            ],
            out_specs=(
                pl.BlockSpec((None, None, 1, _LANES), lambda b, h: (b, h, 0, 0)),
                pl.BlockSpec((None, None, 1, _LANES), lambda b, h: (b, h, 0, 0)),
            ),
        ),
        compiler_params=pltpu.CompilerParams(
            dimension_semantics=("parallel", "parallel"),
            vmem_limit_bytes=vmem_limit),
        cost_estimate=cost,
    )(clamp_lo, inv_2logr, c_b, prob, gt, msk)

    # Final reduction + divide over the tiny partials in JAX glue.
    return jnp.sum(nll_part) / jnp.sum(m_part)


def _reference_loss(depth_prob_volume, gt_depth, mask, depth_values):
    """Pure-JAX transcription of the PyTorch forward (correctness check)."""
    D = depth_values.shape[1]
    log_r = jnp.log(jnp.sqrt(depth_values[:, 1] / depth_values[:, 0]))[:, None, None]
    d0 = depth_values[:, 0][:, None, None]
    indices = (jnp.log(jnp.maximum(gt_depth[:, 0] / d0, 1e-12)) + log_r) / (2 * log_r)
    idx = jnp.clip(indices.astype(jnp.int32), 0, D - 1)[:, None, :, :]
    p = jnp.take_along_axis(depth_prob_volume, idx, axis=1)
    return jnp.sum(-jnp.log(p + 1e-6) * mask) / jnp.sum(mask)


if __name__ == "__main__":
    B, D, H, W = 2, 8, 16, 128
    key = jax.random.PRNGKey(0)
    k1, k2, k3, k4 = jax.random.split(key, 4)

    # Geometric depth hypotheses, slightly different per batch element.
    d_min = 0.5 + 0.1 * jnp.arange(B, dtype=jnp.float32)          # (B,)
    r = 1.25
    depth_values = d_min[:, None] * (r ** jnp.arange(D, dtype=jnp.float32))[None, :]

    # Probability volume (softmax over D so values are valid probabilities).
    logits = jax.random.normal(k1, (B, D, H, W), dtype=jnp.float32)
    depth_prob_volume = jax.nn.softmax(logits, axis=1)

    # Ground-truth depth placed well inside the depth bins (idx_f ~ k + 0.5),
    # so the truncation-to-int is robust to fp reassociation in the kernel.
    k_idx = jax.random.randint(k2, (B, 1, H, W), 0, D)
    t_jit = jax.random.uniform(k3, (B, 1, H, W), minval=-0.35, maxval=0.35)
    d0b = depth_values[:, 0][:, None, None, None]
    gt_depth = d0b * (r ** (k_idx.astype(jnp.float32) + t_jit))

    mask = (jax.random.uniform(k4, (B, 1, H, W)) < 0.7).astype(jnp.float32)

    loss = depth_log_likelihood_loss(depth_prob_volume, gt_depth, mask, depth_values)
    loss = jax.block_until_ready(loss)

    ref = _reference_loss(depth_prob_volume, gt_depth, mask, depth_values)
    ref = jax.block_until_ready(ref)

    assert jnp.allclose(loss, ref, rtol=1e-5, atol=1e-5), (loss, ref)
    print("KERNEL_OK")
</pallas_src>

<mosaic_0001>
module attributes {stable_mosaic.version = 11 : i64} {
  func.func @_depth_ll_kernel(%arg0: i32, %arg1: i32, %arg2: memref<2xf32, #tpu.memory_space<smem>>, %arg3: memref<2xf32, #tpu.memory_space<smem>>, %arg4: memref<2xf32, #tpu.memory_space<smem>>, %arg5: memref<1x8x16x128xf32, #tpu.memory_space<vmem>>, %arg6: memref<1x16x128xf32, #tpu.memory_space<vmem>>, %arg7: memref<1x16x128xf32, #tpu.memory_space<vmem>>, %arg8: memref<1x1x1x128xf32, #tpu.memory_space<vmem>>, %arg9: memref<1x1x1x128xf32, #tpu.memory_space<vmem>>) attributes {dimension_semantics = [#tpu.dimension_semantics<parallel>, #tpu.dimension_semantics<parallel>], iteration_bounds = array<i64: 2, 1>, scalar_prefetch = 0 : i64, scratch_operands = 0 : i64, tpu.core_type = #tpu.core_type<tc>, window_params = [{transform_indices = @transform_0, window_bounds = array<i64: 2>}, {transform_indices = @transform_1, window_bounds = array<i64: 2>}, {transform_indices = @transform_2, window_bounds = array<i64: 2>}, {transform_indices = @transform_3, window_bounds = array<i64: 1, 8, 16, 128>}, {transform_indices = @transform_4, window_bounds = array<i64: 1, 16, 128>}, {transform_indices = @transform_5, window_bounds = array<i64: 1, 16, 128>}, {transform_indices = @transform_6, window_bounds = array<i64: 1, 1, 1, 128>}, {transform_indices = @transform_7, window_bounds = array<i64: 1, 1, 1, 128>}]} {
    %0 = arith.index_cast %arg0 : i32 to index
    %1 = memref.load %arg2[%0] : memref<2xf32, #tpu.memory_space<smem>>
    %2 = arith.index_cast %arg0 : i32 to index
    %3 = memref.load %arg3[%2] : memref<2xf32, #tpu.memory_space<smem>>
    %4 = arith.index_cast %arg0 : i32 to index
    %5 = memref.load %arg4[%4] : memref<2xf32, #tpu.memory_space<smem>>
    %c0 = arith.constant 0 : index
    %c0_0 = arith.constant 0 : index
    %c0_1 = arith.constant 0 : index
    %6 = vector.load %arg6[%c0, %c0_0, %c0_1] : memref<1x16x128xf32, #tpu.memory_space<vmem>>, vector<1x16x128xf32>
    %7 = vector.shape_cast %6 : vector<1x16x128xf32> to vector<16x128xf32>
    %c0_2 = arith.constant 0 : index
    %c0_3 = arith.constant 0 : index
    %c0_4 = arith.constant 0 : index
    %8 = vector.load %arg7[%c0_2, %c0_3, %c0_4] : memref<1x16x128xf32, #tpu.memory_space<vmem>>, vector<1x16x128xf32>
    %9 = vector.shape_cast %8 : vector<1x16x128xf32> to vector<16x128xf32>
    %10 = vector.broadcast %1 : f32 to vector<16x128xf32>
    %11 = arith.maximumf %7, %10 : vector<16x128xf32>
    %12 = math.log %11 : vector<16x128xf32>
    %13 = vector.broadcast %3 : f32 to vector<16x128xf32>
    %14 = arith.mulf %12, %13 : vector<16x128xf32>
    %15 = vector.broadcast %5 : f32 to vector<16x128xf32>
    %16 = arith.addf %14, %15 : vector<16x128xf32>
    %17 = arith.fptosi %16 : vector<16x128xf32> to vector<16x128xi32>
    %c0_i32 = arith.constant 0 : i32
    %c7_i32 = arith.constant 7 : i32
    %18 = vector.broadcast %c0_i32 : i32 to vector<16x128xi32>
    %19 = arith.maxsi %18, %17 : vector<16x128xi32>
    %20 = vector.broadcast %c7_i32 : i32 to vector<16x128xi32>
    %21 = arith.minsi %20, %19 : vector<16x128xi32>
    %cst = arith.constant 0.000000e+00 : f32
    %22 = vector.broadcast %cst : f32 to vector<16x128xf32>
    %c0_i32_5 = arith.constant 0 : i32
    %23 = vector.broadcast %c0_i32_5 : i32 to vector<16x128xi32>
    %24 = arith.cmpi eq, %21, %23 : vector<16x128xi32>
    %c0_6 = arith.constant 0 : index
    %c0_7 = arith.constant 0 : index
    %c0_8 = arith.constant 0 : index
    %c0_9 = arith.constant 0 : index
    %25 = vector.load %arg5[%c0_6, %c0_7, %c0_8, %c0_9] : memref<1x8x16x128xf32, #tpu.memory_space<vmem>>, vector<1x1x16x128xf32>
    %26 = vector.shape_cast %25 : vector<1x1x16x128xf32> to vector<16x128xf32>
    %27 = arith.select %24, %26, %22 : vector<16x128xi1>, vector<16x128xf32>
    %c1_i32 = arith.constant 1 : i32
    %28 = vector.broadcast %c1_i32 : i32 to vector<16x128xi32>
    %29 = arith.cmpi eq, %21, %28 : vector<16x128xi32>
    %c0_10 = arith.constant 0 : index
    %c1 = arith.constant 1 : index
    %c0_11 = arith.constant 0 : index
    %c0_12 = arith.constant 0 : index
    %30 = vector.load %arg5[%c0_10, %c1, %c0_11, %c0_12] : memref<1x8x16x128xf32, #tpu.memory_space<vmem>>, vector<1x1x16x128xf32>
    %31 = vector.shape_cast %30 : vector<1x1x16x128xf32> to vector<16x128xf32>
    %32 = arith.select %29, %31, %27 : vector<16x128xi1>, vector<16x128xf32>
    %c2_i32 = arith.constant 2 : i32
    %33 = vector.broadcast %c2_i32 : i32 to vector<16x128xi32>
    %34 = arith.cmpi eq, %21, %33 : vector<16x128xi32>
    %c0_13 = arith.constant 0 : index
    %c2 = arith.constant 2 : index
    %c0_14 = arith.constant 0 : index
    %c0_15 = arith.constant 0 : index
    %35 = vector.load %arg5[%c0_13, %c2, %c0_14, %c0_15] : memref<1x8x16x128xf32, #tpu.memory_space<vmem>>, vector<1x1x16x128xf32>
    %36 = vector.shape_cast %35 : vector<1x1x16x128xf32> to vector<16x128xf32>
    %37 = arith.select %34, %36, %32 : vector<16x128xi1>, vector<16x128xf32>
    %c3_i32 = arith.constant 3 : i32
    %38 = vector.broadcast %c3_i32 : i32 to vector<16x128xi32>
    %39 = arith.cmpi eq, %21, %38 : vector<16x128xi32>
    %c0_16 = arith.constant 0 : index
    %c3 = arith.constant 3 : index
    %c0_17 = arith.constant 0 : index
    %c0_18 = arith.constant 0 : index
    %40 = vector.load %arg5[%c0_16, %c3, %c0_17, %c0_18] : memref<1x8x16x128xf32, #tpu.memory_space<vmem>>, vector<1x1x16x128xf32>
    %41 = vector.shape_cast %40 : vector<1x1x16x128xf32> to vector<16x128xf32>
    %42 = arith.select %39, %41, %37 : vector<16x128xi1>, vector<16x128xf32>
    %c4_i32 = arith.constant 4 : i32
    %43 = vector.broadcast %c4_i32 : i32 to vector<16x128xi32>
    %44 = arith.cmpi eq, %21, %43 : vector<16x128xi32>
    %c0_19 = arith.constant 0 : index
    %c4 = arith.constant 4 : index
    %c0_20 = arith.constant 0 : index
    %c0_21 = arith.constant 0 : index
    %45 = vector.load %arg5[%c0_19, %c4, %c0_20, %c0_21] : memref<1x8x16x128xf32, #tpu.memory_space<vmem>>, vector<1x1x16x128xf32>
    %46 = vector.shape_cast %45 : vector<1x1x16x128xf32> to vector<16x128xf32>
    %47 = arith.select %44, %46, %42 : vector<16x128xi1>, vector<16x128xf32>
    %c5_i32 = arith.constant 5 : i32
    %48 = vector.broadcast %c5_i32 : i32 to vector<16x128xi32>
    %49 = arith.cmpi eq, %21, %48 : vector<16x128xi32>
    %c0_22 = arith.constant 0 : index
    %c5 = arith.constant 5 : index
    %c0_23 = arith.constant 0 : index
    %c0_24 = arith.constant 0 : index
    %50 = vector.load %arg5[%c0_22, %c5, %c0_23, %c0_24] : memref<1x8x16x128xf32, #tpu.memory_space<vmem>>, vector<1x1x16x128xf32>
    %51 = vector.shape_cast %50 : vector<1x1x16x128xf32> to vector<16x128xf32>
    %52 = arith.select %49, %51, %47 : vector<16x128xi1>, vector<16x128xf32>
    %c6_i32 = arith.constant 6 : i32
    %53 = vector.broadcast %c6_i32 : i32 to vector<16x128xi32>
    %54 = arith.cmpi eq, %21, %53 : vector<16x128xi32>
    %c0_25 = arith.constant 0 : index
    %c6 = arith.constant 6 : index
    %c0_26 = arith.constant 0 : index
    %c0_27 = arith.constant 0 : index
    %55 = vector.load %arg5[%c0_25, %c6, %c0_26, %c0_27] : memref<1x8x16x128xf32, #tpu.memory_space<vmem>>, vector<1x1x16x128xf32>
    %56 = vector.shape_cast %55 : vector<1x1x16x128xf32> to vector<16x128xf32>
    %57 = arith.select %54, %56, %52 : vector<16x128xi1>, vector<16x128xf32>
    %c7_i32_28 = arith.constant 7 : i32
    %58 = vector.broadcast %c7_i32_28 : i32 to vector<16x128xi32>
    %59 = arith.cmpi eq, %21, %58 : vector<16x128xi32>
    %c0_29 = arith.constant 0 : index
    %c7 = arith.constant 7 : index
    %c0_30 = arith.constant 0 : index
    %c0_31 = arith.constant 0 : index
    %60 = vector.load %arg5[%c0_29, %c7, %c0_30, %c0_31] : memref<1x8x16x128xf32, #tpu.memory_space<vmem>>, vector<1x1x16x128xf32>
    %61 = vector.shape_cast %60 : vector<1x1x16x128xf32> to vector<16x128xf32>
    %62 = arith.select %59, %61, %57 : vector<16x128xi1>, vector<16x128xf32>
    %cst_32 = arith.constant 9.99999997E-7 : f32
    %63 = vector.broadcast %cst_32 : f32 to vector<16x128xf32>
    %64 = arith.addf %62, %63 : vector<16x128xf32>
    %65 = math.log %64 : vector<16x128xf32>
    %cst_33 = arith.constant 0.000000e+00 : f32
    %66 = vector.broadcast %cst_33 : f32 to vector<16x128xf32>
    %67 = arith.subf %66, %65 : vector<16x128xf32>
    %68 = arith.mulf %67, %9 : vector<16x128xf32>
    %cst_34 = arith.constant dense<0.000000e+00> : vector<128xf32>
    %69 = vector.multi_reduction <add>, %68, %cst_34 [0] : vector<16x128xf32> to vector<128xf32>
    %70 = vector.shape_cast %69 : vector<128xf32> to vector<1x128xf32>
    %c0_35 = arith.constant 0 : index
    %c0_36 = arith.constant 0 : index
    %c0_37 = arith.constant 0 : index
    %c0_38 = arith.constant 0 : index
    %71 = vector.load %arg8[%c0_35, %c0_36, %c0_37, %c0_38] : memref<1x1x1x128xf32, #tpu.memory_space<vmem>>, vector<1x1x1x128xf32>
    %72 = vector.shape_cast %71 : vector<1x1x1x128xf32> to vector<1x128xf32>
    %73 = vector.shape_cast %70 : vector<1x128xf32> to vector<1x1x1x128xf32>
    tpu.vector_store %arg8[%c0_35, %c0_36, %c0_37, %c0_38], %73 {strides = array<i32>} : memref<1x1x1x128xf32, #tpu.memory_space<vmem>>, vector<1x1x1x128xf32>,
    %cst_39 = arith.constant dense<0.000000e+00> : vector<128xf32>
    %74 = vector.multi_reduction <add>, %9, %cst_39 [0] : vector<16x128xf32> to vector<128xf32>
    %75 = vector.shape_cast %74 : vector<128xf32> to vector<1x128xf32>
    %c0_40 = arith.constant 0 : index
    %c0_41 = arith.constant 0 : index
    %c0_42 = arith.constant 0 : index
    %c0_43 = arith.constant 0 : index
    %76 = vector.load %arg9[%c0_40, %c0_41, %c0_42, %c0_43] : memref<1x1x1x128xf32, #tpu.memory_space<vmem>>, vector<1x1x1x128xf32>
    %77 = vector.shape_cast %76 : vector<1x1x1x128xf32> to vector<1x128xf32>
    %78 = vector.shape_cast %75 : vector<1x128xf32> to vector<1x1x1x128xf32>
    tpu.vector_store %arg9[%c0_40, %c0_41, %c0_42, %c0_43], %78 {strides = array<i32>} : memref<1x1x1x128xf32, #tpu.memory_space<vmem>>, vector<1x1x1x128xf32>,
    return
  }
  func.func @transform_0(%arg0: i32, %arg1: i32) -> i32 {
    %c0_i32 = arith.constant 0 : i32
    %c0_i32_0 = arith.constant 0 : i32
    return %c0_i32 : i32
  }
  func.func @transform_1(%arg0: i32, %arg1: i32) -> i32 {
    %c0_i32 = arith.constant 0 : i32
    %c0_i32_0 = arith.constant 0 : i32
    return %c0_i32 : i32
  }
  func.func @transform_2(%arg0: i32, %arg1: i32) -> i32 {
    %c0_i32 = arith.constant 0 : i32
    %c0_i32_0 = arith.constant 0 : i32
    return %c0_i32 : i32
  }
  func.func @transform_3(%arg0: i32, %arg1: i32) -> (i32, i32, i32, i32) {
    %c0_i32 = arith.constant 0 : i32
    %c0_i32_0 = arith.constant 0 : i32
    %c0_i32_1 = arith.constant 0 : i32
    return %arg0, %c0_i32, %arg1, %c0_i32_0 : i32, i32, i32, i32
  }
  func.func @transform_4(%arg0: i32, %arg1: i32) -> (i32, i32, i32) {
    %c0_i32 = arith.constant 0 : i32
    %c0_i32_0 = arith.constant 0 : i32
    return %arg0, %arg1, %c0_i32 : i32, i32, i32
  }
  func.func @transform_5(%arg0: i32, %arg1: i32) -> (i32, i32, i32) {
    %c0_i32 = arith.constant 0 : i32
    %c0_i32_0 = arith.constant 0 : i32
    return %arg0, %arg1, %c0_i32 : i32, i32, i32
  }
  func.func @transform_6(%arg0: i32, %arg1: i32) -> (i32, i32, i32, i32) {
    %c0_i32 = arith.constant 0 : i32
    %c0_i32_0 = arith.constant 0 : i32
    %c0_i32_1 = arith.constant 0 : i32
    return %arg0, %arg1, %c0_i32, %c0_i32_0 : i32, i32, i32, i32
  }
  func.func @transform_7(%arg0: i32, %arg1: i32) -> (i32, i32, i32, i32) {
    %c0_i32 = arith.constant 0 : i32
    %c0_i32_0 = arith.constant 0 : i32
    %c0_i32_1 = arith.constant 0 : i32
    return %arg0, %arg1, %c0_i32, %c0_i32_0 : i32, i32, i32, i32
  }
}

</mosaic_0001>

<llo_original>
// kernel: tpu_custom_call.1
$region0: #{tpu_custom_call.1}
  #allocation0 [shape = 'u32[]', space=smem, size = 0x4, offset = 0x4, fixed_abs, tag = 'smem constant byte address 0x4 - core index']
  #allocation1 [shape = 'u32[144,128]{1,0:T(1,128)}', space=vmem, size = 0x12000, scoped, tag = 'internal scratch']
  %s0 = inlined_call_operand.hbm [shape: f32[2], index: 0, kind: input, shape index: {}]
  %s1 = inlined_call_operand.vmem [shape: f32[2], index: 1, kind: input, shape index: {}]
  %s2 = inlined_call_operand.vmem [shape: f32[2], index: 2, kind: input, shape index: {}]
  %s3 = inlined_call_operand.hbm [shape: f32[2,8,16,128], index: 3, kind: input, shape index: {}]
  %s4 = inlined_call_operand.hbm [shape: f32[2,16,128], index: 4, kind: input, shape index: {}]
  %s5 = inlined_call_operand.hbm [shape: f32[2,16,128], index: 5, kind: input, shape index: {}]
  %s6 = inlined_call_operand.hbm [shape: f32[2,1,1,128], index: 6, kind: output, shape index: {0}]
  %s7 = inlined_call_operand.hbm [shape: f32[2,1,1,128], index: 7, kind: output, shape index: {1}]
  %8 = xla_tuple %s6, %s7
  %s9 = sld [smem:[#allocation0]]
  $region89: #{tpu_custom_call.1} parent=0
    _
  %s11 = ssub.s32 1, %s9
  %s12 = scalar_select 0, %s11, %s9
  $region1: #{tpu_custom_call.1} parent=0
    #allocation2 [shape = 'u8[512]{0}', space=smem, size = 0x200, scoped, tag = 'input window, operand 0, single buffered']
    #allocation3 [shape = 's32[2]{0}', space=sflag, size = 0x8, scoped, tag = 'scoped memory for tpu_custom_call.1']
    #allocation4 [shape = 's32[2]{0}', space=sflag, size = 0x8, scoped, tag = 'scoped memory for tpu_custom_call.1']
    #allocation5 [shape = 's32[2]{0}', space=sflag, size = 0x8, scoped, tag = 'scoped memory for tpu_custom_call.1']
    #allocation6 [shape = 's32[2]{0}', space=sflag, size = 0x8, scoped, tag = 'scoped memory for tpu_custom_call.1']
    #allocation7 [shape = 'u8[512]{0}', space=smem, size = 0x200, scoped, tag = 'input window, operand 1, single buffered']
    #allocation8 [shape = 'u8[512]{0}', space=smem, size = 0x200, scoped, tag = 'input window, operand 2, single buffered']
    #allocation9 [shape = 's32[1]{0}', space=sflag, size = 0x4, scoped, tag = 'scoped memory for tpu_custom_call.1']
    #allocation10 [shape = 'u8[131072]{0}', space=vmem, size = 0x20000, scoped, tag = 'input window, operand 3']
    #allocation11 [shape = 'u8[16384]{0}', space=vmem, size = 0x4000, scoped, tag = 'input window, operand 4']
    #allocation12 [shape = 's32[2]{0}', space=sflag, size = 0x8, scoped, tag = 'scoped memory for tpu_custom_call.1']
    #allocation13 [shape = 'u8[16384]{0}', space=vmem, size = 0x4000, scoped, tag = 'input window, operand 5']
    #allocation14 [shape = 'u8[1024]{0}', space=vmem, size = 0x400, scoped, tag = 'output window, operand 0']
    #allocation15 [shape = 'u8[1024]{0}', space=vmem, size = 0x400, scoped, tag = 'output window, operand 1']
    #allocation16 [shape = 's32[2]{0}', space=sflag, size = 0x8, scoped, tag = 'scoped memory for tpu_custom_call.1']
    %13 = vsyncpa [#allocation5], 0
    %14 = vsyncpa [#allocation6], 0
    %15 = vsyncpa [#allocation9], 0
    %16 = vsyncpa [#allocation3], 0
    %s17 = scalar_lea.sflag [#allocation3], 1
    %18 = vsyncpa %s17, 0
    %19 = vsyncpa [#allocation12], 0
    %s20 = scalar_lea.sflag [#allocation12], 1
    %21 = vsyncpa %s20, 0
    %22 = vsyncpa [#allocation4], 0
    %s23 = scalar_lea.sflag [#allocation4], 1
    %24 = vsyncpa %s23, 0
    %25 = vsyncpa [#allocation16], 0
    %s26 = scalar_lea.sflag [#allocation16], 1
    %27 = vsyncpa %s26, 0
    loop: start=0, step=1, limit=4
    $region2: #{tpu_custom_call.1} parent=1 // loop_pre_header
      _
    $region3: #{tpu_custom_call.1} parent=1 // loop_header
      %s29 = sphi 0, %s33
      %p30 = scmp.ge.s32.totalorder %s29, 4
      %s36 = sphi 0, %s48
      %s37 = sphi 0, %s44
      %s38 = sphi 0, %s36
      %s39 = sphi 0, %s37
      %s40 = sphi 0, %s38
      %s41 = sphi 0, %s39
      %s49 = sphi 0, %s49
      %s51 = sphi 0, %s49
      %s52 = sphi 0, %s51
      %s66 = sphi 0, %s52
      %s70 = sphi 0, %s70
      %s72 = sphi 0, %s70
      %s73 = sphi 0, %s72
      %s87 = sphi 0, %s73
      %s91 = sphi 0, %s91
      %s93 = sphi 0, %s91
      %s94 = sphi 0, %s93
      %s108 = sphi 0, %s94
      %s116 = sphi 0, %s118
      %s119 = sphi 0, %s116
      %s120 = sphi 0, %s119
      %s136 = sphi 0, %s120
      %s144 = sphi 0, %s146
      %s147 = sphi 0, %s144
      %s148 = sphi 0, %s147
      %s164 = sphi 0, %s148
      %s172 = sphi 0, %s174
      %s175 = sphi 0, %s172
      %s176 = sphi 0, %s175
      %s192 = sphi 0, %s176
      %s200 = sphi 0, %s202
      %s203 = sphi 0, %s200
      %s204 = sphi 0, %s203
      %s220 = sphi 0, %s204
      %s228 = sphi 0, %s230
      %s231 = sphi 0, %s228
      %s232 = sphi 0, %s231
      %s248 = sphi 0, %s232
    $region4: #{tpu_custom_call.1} parent=1 // loop_header_branch
      %32 = sbr.rel (%p30) target = $region8
    $region5: #{tpu_custom_call.1} parent=1 // loop_body
      %s34 = ssub.s32 %s29, 1
      %s35 = ssub.s32 %s29, 2
      %s42 = sadd.s32 1, %s37
      %p43 = scmp.ge.s32.totalorder %s42, 1
      %s44 = scalar_select %p43, 0, %s42
      %s45 = sadd.s32 1, %s36
      %s46 = scalar_select %p43, %s45, %s36
      %p47 = scmp.ge.s32.totalorder %s46, 2
      %s48 = scalar_select %p47, 0, %s46
      %s50 = sadd.s32 %s49, 1
      %p53 = scmp.eq.s32.totalorder %s29, 1
      %p54 = scmp.ne.s32.totalorder %s49, %s51
      %p55 = scmp.eq.s32.totalorder %s29, 0
      %p56 = por %p54, %p55
      %p57 = scmp.ne.s32.totalorder %s49, %s51
      %p58 = scmp.eq.s32.totalorder %s34, 1
      %p59 = por %p57, %p58
      %p60 = scmp.ne.s32.totalorder %s51, %s52
      %p61 = scmp.eq.s32.totalorder %s34, 0
      %p62 = por %p60, %p61
      %p63 = scmp.ne.s32.totalorder %s51, %s52
      %p64 = scmp.eq.s32.totalorder %s35, 1
      %p65 = por %p63, %p64
      %p67 = scmp.ne.s32.totalorder %s52, %s66
      %p68 = scmp.eq.s32.totalorder %s35, 0
      %p69 = por %p67, %p68
      %s71 = sadd.s32 %s70, 1
      %p74 = scmp.eq.s32.totalorder %s29, 1
      %p75 = scmp.ne.s32.totalorder %s70, %s72
      %p76 = scmp.eq.s32.totalorder %s29, 0
      %p77 = por %p75, %p76
      %p78 = scmp.ne.s32.totalorder %s70, %s72
      %p79 = scmp.eq.s32.totalorder %s34, 1
      %p80 = por %p78, %p79
      %p81 = scmp.ne.s32.totalorder %s72, %s73
      %p82 = scmp.eq.s32.totalorder %s34, 0
      %p83 = por %p81, %p82
      %p84 = scmp.ne.s32.totalorder %s72, %s73
      %p85 = scmp.eq.s32.totalorder %s35, 1
      %p86 = por %p84, %p85
      %p88 = scmp.ne.s32.totalorder %s73, %s87
      %p89 = scmp.eq.s32.totalorder %s35, 0
      %p90 = por %p88, %p89
      %s92 = sadd.s32 %s91, 1
      %p95 = scmp.eq.s32.totalorder %s29, 1
      %p96 = scmp.ne.s32.totalorder %s91, %s93
      %p97 = scmp.eq.s32.totalorder %s29, 0
      %p98 = por %p96, %p97
      %p99 = scmp.ne.s32.totalorder %s91, %s93
      %p100 = scmp.eq.s32.totalorder %s34, 1
      %p101 = por %p99, %p100
      %p102 = scmp.ne.s32.totalorder %s93, %s94
      %p103 = scmp.eq.s32.totalorder %s34, 0
      %p104 = por %p102, %p103
      %p105 = scmp.ne.s32.totalorder %s93, %s94
      %p106 = scmp.eq.s32.totalorder %s35, 1
      %p107 = por %p105, %p106
      %p109 = scmp.ne.s32.totalorder %s94, %s108
      %p110 = scmp.eq.s32.totalorder %s35, 0
      %p111 = por %p109, %p110
      %s112 = ssub.s32 %s36, %s48
      %s113 = ssub.s32 %s37, %s44
      %s114 = sor.u32 %s112, %s113
      %p115 = scmp.eq.s32.totalorder %s114, 0
      %s117 = sadd.s32 %s116, 1
      %s118 = scalar_select %p115, %s116, %s117
      %p121 = pneg %p115
      %p122 = scmp.eq.s32.totalorder %s29, 1
      %p123 = por %p121, %p122
      %p124 = scmp.ne.s32.totalorder %s116, %s119
      %p125 = scmp.eq.s32.totalorder %s29, 0
      %p126 = por %p124, %p125
      %p127 = scmp.ne.s32.totalorder %s116, %s119
      %p128 = scmp.eq.s32.totalorder %s34, 1
      %p129 = por %p127, %p128
      %p130 = scmp.ne.s32.totalorder %s119, %s120
      %p131 = scmp.eq.s32.totalorder %s34, 0
      %p132 = por %p130, %p131
      %p133 = scmp.ne.s32.totalorder %s119, %s120
      %p134 = scmp.eq.s32.totalorder %s35, 1
      %p135 = por %p133, %p134
      %p137 = scmp.ne.s32.totalorder %s120, %s136
      %p138 = scmp.eq.s32.totalorder %s35, 0
      %p139 = por %p137, %p138
      %s140 = ssub.s32 %s36, %s48
      %s141 = ssub.s32 %s37, %s44
      %s142 = sor.u32 %s140, %s141
      %p143 = scmp.eq.s32.totalorder %s142, 0
      %s145 = sadd.s32 %s144, 1
      %s146 = scalar_select %p143, %s144, %s145
      %p149 = pneg %p143
      %p150 = scmp.eq.s32.totalorder %s29, 1
      %p151 = por %p149, %p150
      %p152 = scmp.ne.s32.totalorder %s144, %s147
      %p153 = scmp.eq.s32.totalorder %s29, 0
      %p154 = por %p152, %p153
      %p155 = scmp.ne.s32.totalorder %s144, %s147
      %p156 = scmp.eq.s32.totalorder %s34, 1
      %p157 = por %p155, %p156
      %p158 = scmp.ne.s32.totalorder %s147, %s148
      %p159 = scmp.eq.s32.totalorder %s34, 0
      %p160 = por %p158, %p159
      %p161 = scmp.ne.s32.totalorder %s147, %s148
      %p162 = scmp.eq.s32.totalorder %s35, 1
      %p163 = por %p161, %p162
      %p165 = scmp.ne.s32.totalorder %s148, %s164
      %p166 = scmp.eq.s32.totalorder %s35, 0
      %p167 = por %p165, %p166
      %s168 = ssub.s32 %s36, %s48
      %s169 = ssub.s32 %s37, %s44
      %s170 = sor.u32 %s168, %s169
      %p171 = scmp.eq.s32.totalorder %s170, 0
      %s173 = sadd.s32 %s172, 1
      %s174 = scalar_select %p171, %s172, %s173
      %p177 = pneg %p171
      %p178 = scmp.eq.s32.totalorder %s29, 1
      %p179 = por %p177, %p178
      %p180 = scmp.ne.s32.totalorder %s172, %s175
      %p181 = scmp.eq.s32.totalorder %s29, 0
      %p182 = por %p180, %p181
      %p183 = scmp.ne.s32.totalorder %s172, %s175
      %p184 = scmp.eq.s32.totalorder %s34, 1
      %p185 = por %p183, %p184
      %p186 = scmp.ne.s32.totalorder %s175, %s176
      %p187 = scmp.eq.s32.totalorder %s34, 0
      %p188 = por %p186, %p187
      %p189 = scmp.ne.s32.totalorder %s175, %s176
      %p190 = scmp.eq.s32.totalorder %s35, 1
      %p191 = por %p189, %p190
      %p193 = scmp.ne.s32.totalorder %s176, %s192
      %p194 = scmp.eq.s32.totalorder %s35, 0
      %p195 = por %p193, %p194
      %s196 = ssub.s32 %s36, %s48
      %s197 = ssub.s32 %s37, %s44
      %s198 = sor.u32 %s196, %s197
      %p199 = scmp.eq.s32.totalorder %s198, 0
      %s201 = sadd.s32 %s200, 1
      %s202 = scalar_select %p199, %s200, %s201
      %p205 = pneg %p199
      %p206 = scmp.eq.s32.totalorder %s29, 1
      %p207 = por %p205, %p206
      %p208 = scmp.ne.s32.totalorder %s200, %s203
      %p209 = scmp.eq.s32.totalorder %s29, 0
      %p210 = por %p208, %p209
      %p211 = scmp.ne.s32.totalorder %s200, %s203
      %p212 = scmp.eq.s32.totalorder %s34, 1
      %p213 = por %p211, %p212
      %p214 = scmp.ne.s32.totalorder %s203, %s204
      %p215 = scmp.eq.s32.totalorder %s34, 0
      %p216 = por %p214, %p215
      %p217 = scmp.ne.s32.totalorder %s203, %s204
      %p218 = scmp.eq.s32.totalorder %s35, 1
      %p219 = por %p217, %p218
      %p221 = scmp.ne.s32.totalorder %s204, %s220
      %p222 = scmp.eq.s32.totalorder %s35, 0
      %p223 = por %p221, %p222
      %s224 = ssub.s32 %s36, %s48
      %s225 = ssub.s32 %s37, %s44
      %s226 = sor.u32 %s224, %s225
      %p227 = scmp.eq.s32.totalorder %s226, 0
      %s229 = sadd.s32 %s228, 1
      %s230 = scalar_select %p227, %s228, %s229
      %p233 = pneg %p227
      %p234 = scmp.eq.s32.totalorder %s29, 1
      %p235 = por %p233, %p234
      %p236 = scmp.ne.s32.totalorder %s228, %s231
      %p237 = scmp.eq.s32.totalorder %s29, 0
      %p238 = por %p236, %p237
      %p239 = scmp.ne.s32.totalorder %s228, %s231
      %p240 = scmp.eq.s32.totalorder %s34, 1
      %p241 = por %p239, %p240
      %p242 = scmp.ne.s32.totalorder %s231, %s232
      %p243 = scmp.eq.s32.totalorder %s34, 0
      %p244 = por %p242, %p243
      %p245 = scmp.ne.s32.totalorder %s231, %s232
      %p246 = scmp.eq.s32.totalorder %s35, 1
      %p247 = por %p245, %p246
      %p249 = scmp.ne.s32.totalorder %s232, %s248
      %p250 = scmp.eq.s32.totalorder %s35, 0
      %p251 = por %p249, %p250
      %p252 = scmp.le.s32.totalorder 1, %s29
      %p253 = scmp.lt.s32.totalorder %s29, 3
      %p254 = pnand %p252, %p253
      %p255 = pneg %p254
      // Predicated region
      $region9: #{tpu_custom_call.1} parent=5 // pred_check
        _
      $region10: #{tpu_custom_call.1} parent=5 // pred_check_branch
        %257 = sbr.rel (%p254) target = $region12
      $region11: #{tpu_custom_call.1} parent=5 // pred_region
        %s258 = ssub.s32 %s29, 1
        // Predicated region
        $region13: #{tpu_custom_call.1} parent=11 // pred_check
          %p259 = pneg %p62
        $region14: #{tpu_custom_call.1} parent=11 // pred_check_branch
          %261 = sbr.rel (%p259) target = $region16
        $region15: #{tpu_custom_call.1} parent=11 // pred_region
          %s263 = ssub.s32 16, 16
          %264 = vsyncadd [#allocation5], %s263
          %267 = dma.hbm_to_smem %s0, 16, [#allocation2], [#allocation5]
        $region16: #{tpu_custom_call.1} parent=11 // pred_fallthru
          _
        // Predicated region
        $region17: #{tpu_custom_call.1} parent=11 // pred_check
          %p268 = pneg %p83
        $region18: #{tpu_custom_call.1} parent=11 // pred_check_branch
          %270 = sbr.rel (%p268) target = $region20
        $region19: #{tpu_custom_call.1} parent=11 // pred_region
          %s272 = ssub.s32 16, 16
          %273 = vsyncadd [#allocation6], %s272
          %s275 = sshll.u32 %s1, 4
          %s276 = int_to_ptr.vmem [resolvable:$true] %s275
          %278 = dma.vmem_to_smem %s276, 16, [#allocation7], [#allocation6]
        $region20: #{tpu_custom_call.1} parent=11 // pred_fallthru
          _
        // Predicated region
        $region21: #{tpu_custom_call.1} parent=11 // pred_check
          %p279 = pneg %p104
        $region22: #{tpu_custom_call.1} parent=11 // pred_check_branch
          %281 = sbr.rel (%p279) target = $region24
        $region23: #{tpu_custom_call.1} parent=11 // pred_region
          %s283 = ssub.s32 16, 16
          %284 = vsyncadd [#allocation9], %s283
          %s286 = sshll.u32 %s2, 4
          %s287 = int_to_ptr.vmem [resolvable:$true] %s286
          %289 = dma.vmem_to_smem %s287, 16, [#allocation8], [#allocation9]
        $region24: #{tpu_custom_call.1} parent=11 // pred_fallthru
          _
      $region12: #{tpu_custom_call.1} parent=5 // pred_fallthru
        _
      %p290 = scmp.lt.s32.totalorder %s29, 2
      // Predicated region
      $region25: #{tpu_custom_call.1} parent=5 // pred_check
        %p291 = pneg %p290
      $region26: #{tpu_custom_call.1} parent=5 // pred_check_branch
        %293 = sbr.rel (%p291) target = $region28
      $region27: #{tpu_custom_call.1} parent=5 // pred_region
        // Predicated region
        $region29: #{tpu_custom_call.1} parent=27 // pred_check
          %p294 = pneg %p126
        $region30: #{tpu_custom_call.1} parent=27 // pred_check_branch
          %296 = sbr.rel (%p294) target = $region32
        $region31: #{tpu_custom_call.1} parent=27 // pred_region
          %s297 = sand.u32 %s116, 1
          %s298 = scalar_lea.sflag [#allocation3], %s297
          %s299 = sand.u32 %s116, 1
          %s300 = smul.addr %s299, 128
          %s301 = scalar_lea.vmem [#allocation10], %s300
          %s302 = smul.u32 2, %s37
          %s304 = ssub.s32 2048, 2048
          %305 = vsyncadd %s298, %s304
          %s306 = smul.addr %s36, 16
          %s307 = sadd.s32 %s302, %s306
          %s308 = smul.addr %s307, 128
          %s309 = scalar_lea.hbm %s3, %s308
          %s310 = sshll.u32 %s301, 4
          %s311 = int_to_ptr.vmem [resolvable:$true] %s310
          %316 = dma.hbm_to_vmem [thread:$0]  %s309, 2048, %s311, %s298, 128, 128, 8
        $region32: #{tpu_custom_call.1} parent=27 // pred_fallthru
          _
        // Predicated region
        $region33: #{tpu_custom_call.1} parent=27 // pred_check
          %p317 = pneg %p154
        $region34: #{tpu_custom_call.1} parent=27 // pred_check_branch
          %319 = sbr.rel (%p317) target = $region36
        $region35: #{tpu_custom_call.1} parent=27 // pred_region
          %s320 = sand.u32 %s29, 1
          %s321 = scalar_lea.sflag [#allocation12], %s320
          %s322 = sand.u32 %s144, 1
          %s323 = smul.addr %s322, 16
          %s324 = scalar_lea.vmem [#allocation11], %s323
          %s325 = smul.u32 2, %s37
          %s327 = ssub.s32 256, 256
          %328 = vsyncadd %s321, %s327
          %s329 = smul.addr %s36, 2
          %s330 = sadd.s32 %s325, %s329
          %s331 = smul.addr %s330, 128
          %s332 = scalar_lea.hbm %s4, %s331
          %s333 = sshll.u32 %s324, 4
          %s334 = int_to_ptr.vmem [resolvable:$true] %s333
          %339 = dma.hbm_to_vmem [thread:$0]  %s332, 256, %s334, %s321, 128, 128, 8
        $region36: #{tpu_custom_call.1} parent=27 // pred_fallthru
          _
        // Predicated region
        $region37: #{tpu_custom_call.1} parent=27 // pred_check
          %p340 = pneg %p182
        $region38: #{tpu_custom_call.1} parent=27 // pred_check_branch
          %342 = sbr.rel (%p340) target = $region40
        $region39: #{tpu_custom_call.1} parent=27 // pred_region
          %s343 = sand.u32 %s29, 1
          %s344 = scalar_lea.sflag [#allocation12], %s343
          %s345 = sand.u32 %s172, 1
          %s346 = smul.addr %s345, 16
          %s347 = scalar_lea.vmem [#allocation13], %s346
          %s348 = smul.u32 2, %s37
          %s350 = ssub.s32 256, 256
          %351 = vsyncadd %s344, %s350
          %s352 = smul.addr %s36, 2
          %s353 = sadd.s32 %s348, %s352
          %s354 = smul.addr %s353, 128
          %s355 = scalar_lea.hbm %s5, %s354
          %s356 = sshll.u32 %s347, 4
          %s357 = int_to_ptr.vmem [resolvable:$true] %s356
          %362 = dma.hbm_to_vmem [thread:$0]  %s355, 256, %s357, %s344, 128, 128, 8
        $region40: #{tpu_custom_call.1} parent=27 // pred_fallthru
          _
      $region28: #{tpu_custom_call.1} parent=5 // pred_fallthru
        _
      %p363 = scmp.le.s32.totalorder 1, %s29
      %p364 = scmp.lt.s32.totalorder %s29, 3
      %p365 = pnand %p363, %p364
      %p366 = pneg %p365
      // Predicated region
      $region41: #{tpu_custom_call.1} parent=5 // pred_check
        _
      $region42: #{tpu_custom_call.1} parent=5 // pred_check_branch
        %368 = sbr.rel (%p365) target = $region44
      $region43: #{tpu_custom_call.1} parent=5 // pred_region
        %s369 = ssub.s32 %s29, 1
        // Predicated region
        $region45: #{tpu_custom_call.1} parent=43 // pred_check
          %p370 = pneg %p62
        $region46: #{tpu_custom_call.1} parent=43 // pred_check_branch
          %372 = sbr.rel (%p370) target = $region48
        $region47: #{tpu_custom_call.1} parent=43 // pred_region
          %373 = dma.done [#allocation5], 16
        $region48: #{tpu_custom_call.1} parent=43 // pred_fallthru
          _
        // Predicated region
        $region49: #{tpu_custom_call.1} parent=43 // pred_check
          %p374 = pneg %p83
        $region50: #{tpu_custom_call.1} parent=43 // pred_check_branch
          %376 = sbr.rel (%p374) target = $region52
        $region51: #{tpu_custom_call.1} parent=43 // pred_region
          %377 = dma.done [#allocation6], 16
        $region52: #{tpu_custom_call.1} parent=43 // pred_fallthru
          _
        // Predicated region
        $region53: #{tpu_custom_call.1} parent=43 // pred_check
          %p378 = pneg %p104
        $region54: #{tpu_custom_call.1} parent=43 // pred_check_branch
          %380 = sbr.rel (%p378) target = $region56
        $region55: #{tpu_custom_call.1} parent=43 // pred_region
          %381 = dma.done [#allocation9], 16
        $region56: #{tpu_custom_call.1} parent=43 // pred_fallthru
          _
        %s382 = sand.u32 %s119, 1
        %s383 = scalar_lea.sflag [#allocation3], %s382
        %s384 = sand.u32 %s119, 1
        %s385 = smul.addr %s384, 128
        %s386 = scalar_lea.vmem [#allocation10], %s385
        // Predicated region
        $region57: #{tpu_custom_call.1} parent=43 // pred_check
          %p387 = pneg %p132
        $region58: #{tpu_custom_call.1} parent=43 // pred_check_branch
          %389 = sbr.rel (%p387) target = $region60
        $region59: #{tpu_custom_call.1} parent=43 // pred_region
          %390 = dma.done %s383, 2048
        $region60: #{tpu_custom_call.1} parent=43 // pred_fallthru
          _
        %s391 = sand.u32 %s34, 1
        %s392 = scalar_lea.sflag [#allocation12], %s391
        %s393 = sand.u32 %s147, 1
        %s394 = smul.addr %s393, 16
        %s395 = scalar_lea.vmem [#allocation11], %s394
        // Predicated region
        $region61: #{tpu_custom_call.1} parent=43 // pred_check
          %p396 = pneg %p160
        $region62: #{tpu_custom_call.1} parent=43 // pred_check_branch
          %398 = sbr.rel (%p396) target = $region64
        $region63: #{tpu_custom_call.1} parent=43 // pred_region
          %399 = dma.done %s392, 256
        $region64: #{tpu_custom_call.1} parent=43 // pred_fallthru
          _
        %s400 = sand.u32 %s34, 1
        %s401 = scalar_lea.sflag [#allocation12], %s400
        %s402 = sand.u32 %s175, 1
        %s403 = smul.addr %s402, 16
        %s404 = scalar_lea.vmem [#allocation13], %s403
        // Predicated region
        $region65: #{tpu_custom_call.1} parent=43 // pred_check
          %p405 = pneg %p188
        $region66: #{tpu_custom_call.1} parent=43 // pred_check_branch
          %407 = sbr.rel (%p405) target = $region68
        $region67: #{tpu_custom_call.1} parent=43 // pred_region
          %408 = dma.done %s401, 256
        $region68: #{tpu_custom_call.1} parent=43 // pred_fallthru
          _
        %409 = sfence
        %p410 = pneg %p62
        %p411 = pneg %p59
        %p412 = pneg %p83
        %p413 = pneg %p80
        %p414 = pneg %p104
        %p415 = pneg %p101
        %s416 = sand.u32 %s119, 1
        %s417 = scalar_lea.sflag [#allocation3], %s416
        %s418 = sand.u32 %s119, 1
        %s419 = smul.addr %s418, 128
        %s420 = scalar_lea.vmem [#allocation10], %s419
        %p421 = pneg %p132
        %p422 = pneg %p129
        %s423 = sand.u32 %s34, 1
        %s424 = scalar_lea.sflag [#allocation12], %s423
        %s425 = sand.u32 %s147, 1
        %s426 = smul.addr %s425, 16
        %s427 = scalar_lea.vmem [#allocation11], %s426
        %p428 = pneg %p160
        %p429 = pneg %p157
        %s430 = sand.u32 %s34, 1
        %s431 = scalar_lea.sflag [#allocation12], %s430
        %s432 = sand.u32 %s175, 1
        %s433 = smul.addr %s432, 16
        %s434 = scalar_lea.vmem [#allocation13], %s433
        %p435 = pneg %p188
        %p436 = pneg %p185
        %p437 = pneg %p216
        %p438 = pneg %p213
        %s439 = sand.u32 %s203, 1
        %s440 = scalar_lea.sflag [#allocation4], %s439
        %s441 = sand.u32 %s203, 1
        %s442 = scalar_lea.vmem [#allocation14], %s441
        %p443 = pneg %p244
        %p444 = pneg %p241
        %s445 = sand.u32 %s231, 1
        %s446 = scalar_lea.sflag [#allocation16], %s445
        %s447 = sand.u32 %s231, 1
        %s448 = scalar_lea.vmem [#allocation15], %s447
        %s449 = smul.u32 2, %s39
        %s450 = smul.u32 2, %s39
        %s451 = smul.u32 2, %s39
        %s452 = sld [smem:[#allocation2 + %s38]]
        %s453 = sld [smem:[#allocation7 + %s38]]
        %s454 = sld [smem:[#allocation8 + %s38]]
        %v455 = vld [vmem:[%s395] sm:$0xff]
        %v456 = vld [vmem:[%s395 + $0x8] sm:$0xff]
        %v457 = vld [vmem:[%s404] sm:$0xff]
        %v458 = vld [vmem:[%s404 + $0x8] sm:$0xff]
        %v459 = vstv %s452
        %v460 = vmax.f32 %v455, %v459
        %v461 = vmax.f32 %v456, %v459
        %v462 = vlog2.pop %v460
        %v463 = vmul.f32 %v462, 0.6931472
        %v464 = vlog2.pop %v461
        %v465 = vmul.f32 %v464, 0.6931472
        %v466 = vstv %s453
        %v467 = vmul.f32 %v463, %v466
        %v468 = vmul.f32 %v465, %v466
        %v469 = vstv %s454
        %v470 = vadd.f32 %v467, %v469
        %v471 = vadd.f32 %v468, %v469
        %v472 = vcvt.f32.s32.to.zero.pseudo %v470
        %v473 = vcvt.f32.s32.to.zero.pseudo %v471
        %vm474 = vcmp.gt.s32.totalorder %v472, 0
        %v475 = vsel %vm474, %v472, 0
        %vm476 = vcmp.gt.s32.totalorder %v473, 0
        %v477 = vsel %vm476, %v473, 0
        %vm478 = vcmp.lt.s32.totalorder %v475, 7
        %v479 = vsel %vm478, %v475, 7
        %vm480 = vcmp.lt.s32.totalorder %v477, 7
        %v481 = vsel %vm480, %v477, 7
        %vm482 = vcmp.eq.s32.totalorder %v479, 0
        %vm483 = vcmp.eq.s32.totalorder %v481, 0
        %v484 = vld [vmem:[%s386] sm:$0xff]
        %v485 = vld [vmem:[%s386 + $0x8] sm:$0xff]
        %v486 = vsel %vm482, %v484, 0.0
        %v487 = vsel %vm483, %v485, 0.0
        %vm488 = vcmp.eq.s32.totalorder %v479, 1
        %vm489 = vcmp.eq.s32.totalorder %v481, 1
        %s490 = scalar_lea.vmem %s386, 16 [#allocation10]
        %v491 = vld [vmem:[%s490] sm:$0xff]
        %v492 = vld [vmem:[%s490 + $0x8] sm:$0xff]
        %v493 = vsel %vm488, %v491, %v486
        %v494 = vsel %vm489, %v492, %v487
        %vm495 = vcmp.eq.s32.totalorder %v479, 2
        %vm496 = vcmp.eq.s32.totalorder %v481, 2
        %s497 = scalar_lea.vmem %s386, 32 [#allocation10]
        %v498 = vld [vmem:[%s497] sm:$0xff]
        %v499 = vld [vmem:[%s497 + $0x8] sm:$0xff]
        %v500 = vsel %vm495, %v498, %v493
        %v501 = vsel %vm496, %v499, %v494
        %vm502 = vcmp.eq.s32.totalorder %v479, 3
        %vm503 = vcmp.eq.s32.totalorder %v481, 3
        %s504 = scalar_lea.vmem %s386, 48 [#allocation10]
        %v505 = vld [vmem:[%s504] sm:$0xff]
        %v506 = vld [vmem:[%s504 + $0x8] sm:$0xff]
        %v507 = vsel %vm502, %v505, %v500
        %v508 = vsel %vm503, %v506, %v501
        %vm509 = vcmp.eq.s32.totalorder %v479, 4
        %vm510 = vcmp.eq.s32.totalorder %v481, 4
        %s511 = scalar_lea.vmem %s386, 64 [#allocation10]
        %v512 = vld [vmem:[%s511] sm:$0xff]
        %v513 = vld [vmem:[%s511 + $0x8] sm:$0xff]
        %v514 = vsel %vm509, %v512, %v507
        %v515 = vsel %vm510, %v513, %v508
        %vm516 = vcmp.eq.s32.totalorder %v479, 5
        %vm517 = vcmp.eq.s32.totalorder %v481, 5
        %s518 = scalar_lea.vmem %s386, 80 [#allocation10]
        %v519 = vld [vmem:[%s518] sm:$0xff]
        %v520 = vld [vmem:[%s518 + $0x8] sm:$0xff]
        %v521 = vsel %vm516, %v519, %v514
        %v522 = vsel %vm517, %v520, %v515
        %vm523 = vcmp.eq.s32.totalorder %v479, 6
        %vm524 = vcmp.eq.s32.totalorder %v481, 6
        %s525 = scalar_lea.vmem %s386, 96 [#allocation10]
        %v526 = vld [vmem:[%s525] sm:$0xff]
        %v527 = vld [vmem:[%s525 + $0x8] sm:$0xff]
        %v528 = vsel %vm523, %v526, %v521
        %v529 = vsel %vm524, %v527, %v522
        %vm530 = vcmp.eq.s32.totalorder %v479, 7
        %vm531 = vcmp.eq.s32.totalorder %v481, 7
        %s532 = scalar_lea.vmem %s386, 112 [#allocation10]
        %v533 = vld [vmem:[%s532] sm:$0xff]
        %v534 = vld [vmem:[%s532 + $0x8] sm:$0xff]
        %v535 = vsel %vm530, %v533, %v528
        %v536 = vsel %vm531, %v534, %v529
        %v537 = vadd.f32 %v535, 1e-06
        %v538 = vadd.f32 %v536, 1e-06
        %v539 = vlog2.pop %v537
        %v540 = vmul.f32 %v539, 0.6931472
        %v541 = vlog2.pop %v538
        %v542 = vmul.f32 %v541, 0.6931472
        %v543 = vsub.f32 0.0, %v540
        %v544 = vsub.f32 0.0, %v542
        %v545 = vmul.f32 %v543, %v457
        %v546 = vmul.f32 %v544, %v458
        %v547 = vadd.f32 %v545, %v546
        %v548 = vrot.slane %v547, 4
        %v549 = vadd.f32 %v547, %v548
        %v550 = vrot.slane %v549, 2
        %v551 = vadd.f32 %v549, %v550
        %v552 = vrot.slane %v551, 1
        %v553 = vadd.f32 %v551, %v552
        %554 = vst [vmem:[%s442] sm:$0x1] %v553
        %v555 = vadd.f32 %v457, %v458
        %v556 = vrot.slane %v555, 4
        %v557 = vadd.f32 %v555, %v556
        %v558 = vrot.slane %v557, 2
        %v559 = vadd.f32 %v557, %v558
        %v560 = vrot.slane %v559, 1
        %v561 = vadd.f32 %v559, %v560
        %562 = vst [vmem:[%s448] sm:$0x1] %v561
        %s563 = sand.u32 %s203, 1
        %s564 = scalar_lea.sflag [#allocation4], %s563
        %s565 = sand.u32 %s203, 1
        %s566 = scalar_lea.vmem [#allocation14], %s565
        %s567 = sand.u32 %s231, 1
        %s568 = scalar_lea.sflag [#allocation16], %s567
        %s569 = sand.u32 %s231, 1
        %s570 = scalar_lea.vmem [#allocation15], %s569
        // Predicated region
        $region69: #{tpu_custom_call.1} parent=43 // pred_check
          %p571 = pneg %p213
        $region70: #{tpu_custom_call.1} parent=43 // pred_check_branch
          %573 = sbr.rel (%p571) target = $region72
        $region71: #{tpu_custom_call.1} parent=43 // pred_region
          %s575 = ssub.s32 16, 16
          %576 = vsyncadd %s564, %s575
          %s577 = sadd.s32 %s39, %s38
          %s578 = smul.addr %s577, 16
          %s579 = scalar_lea.hbm %s6, %s578
          %s581 = sshll.u32 %s566, 4
          %s582 = int_to_ptr.vmem [resolvable:$true] %s581
          %584 = dma.vmem_to_hbm [thread:$0]  %s582, 16, %s579, %s564
        $region72: #{tpu_custom_call.1} parent=43 // pred_fallthru
          _
        // Predicated region
        $region73: #{tpu_custom_call.1} parent=43 // pred_check
          %p585 = pneg %p241
        $region74: #{tpu_custom_call.1} parent=43 // pred_check_branch
          %587 = sbr.rel (%p585) target = $region76
        $region75: #{tpu_custom_call.1} parent=43 // pred_region
          %s589 = ssub.s32 16, 16
          %590 = vsyncadd %s568, %s589
          %s591 = sadd.s32 %s39, %s38
          %s592 = smul.addr %s591, 16
          %s593 = scalar_lea.hbm %s7, %s592
          %s595 = sshll.u32 %s570, 4
          %s596 = int_to_ptr.vmem [resolvable:$true] %s595
          %598 = dma.vmem_to_hbm [thread:$0]  %s596, 16, %s593, %s568
        $region76: #{tpu_custom_call.1} parent=43 // pred_fallthru
          _
      $region44: #{tpu_custom_call.1} parent=5 // pred_fallthru
        _
      %p599 = scmp.le.s32.totalorder 2, %s29
      // Predicated region
      $region77: #{tpu_custom_call.1} parent=5 // pred_check
        %p600 = pneg %p599
      $region78: #{tpu_custom_call.1} parent=5 // pred_check_branch
        %602 = sbr.rel (%p600) target = $region80
      $region79: #{tpu_custom_call.1} parent=5 // pred_region
        %s603 = ssub.s32 %s29, 2
        // Predicated region
        $region81: #{tpu_custom_call.1} parent=79 // pred_check
          %p604 = pneg %p219
        $region82: #{tpu_custom_call.1} parent=79 // pred_check_branch
          %606 = sbr.rel (%p604) target = $region84
        $region83: #{tpu_custom_call.1} parent=79 // pred_region
          %s607 = sand.u32 %s204, 1
          %s608 = scalar_lea.sflag [#allocation4], %s607
          %s609 = sand.u32 %s204, 1
          %s610 = scalar_lea.vmem [#allocation14], %s609
          %611 = dma.done %s608, 16
        $region84: #{tpu_custom_call.1} parent=79 // pred_fallthru
          _
        // Predicated region
        $region85: #{tpu_custom_call.1} parent=79 // pred_check
          %p612 = pneg %p247
        $region86: #{tpu_custom_call.1} parent=79 // pred_check_branch
          %614 = sbr.rel (%p612) target = $region88
        $region87: #{tpu_custom_call.1} parent=79 // pred_region
          %s615 = sand.u32 %s232, 1
          %s616 = scalar_lea.sflag [#allocation16], %s615
          %s617 = sand.u32 %s232, 1
          %s618 = scalar_lea.vmem [#allocation15], %s617
          %619 = dma.done %s616, 16
        $region88: #{tpu_custom_call.1} parent=79 // pred_fallthru
          _
      $region80: #{tpu_custom_call.1} parent=5 // pred_fallthru
        _
    $region6: #{tpu_custom_call.1} parent=1 // loop_footer
      %s33 = sadd.s32 1, %s29
    $region7: #{tpu_custom_call.1} parent=1 // loop_footer_branch
      %28 = sbr.rel target = $region3
    $region8: #{tpu_custom_call.1} parent=1 // loop_exit
      _
    %620 = vsyncpa [#allocation3], 1
    %s621 = scalar_lea.sflag [#allocation3], 1
    %622 = vsyncpa %s621, 1
    %623 = vsyncpa [#allocation12], 1
    %s624 = scalar_lea.sflag [#allocation12], 1
    %625 = vsyncpa %s624, 1
    %626 = vsyncpa [#allocation4], 1
    %s627 = scalar_lea.sflag [#allocation4], 1
    %628 = vsyncpa %s627, 1
    %629 = vsyncpa [#allocation16], 1
    %s630 = scalar_lea.sflag [#allocation16], 1
    %631 = vsyncpa %s630, 1
    %632 = vsyncpa [#allocation5], 1
    %s633 = scalar_lea.sflag [#allocation5], 1
    %634 = vsyncpa %s633, 1
    %635 = vsyncpa [#allocation6], 1
    %s636 = scalar_lea.sflag [#allocation6], 1
    %637 = vsyncpa %s636, 1
    %638 = vsyncpa [#allocation9], 1

</llo_original>
